<compile_context>
chip_gen: v7x
topology: tpu7x:2x2x1
jax: 0.10.0
libtpu: 0.0.40
codegen_flags: <defaults>
</compile_context>

<pallas_src>
import math

import jax
import jax.numpy as jnp
from jax.experimental import pallas as pl
from jax.experimental.pallas import tpu as pltpu

_LANE = 128
_SUBLANE = 8
_TILE_BYTES = 2 * 1024 * 1024   # per-buffer tile budget (x4 for double-buffered in+out)
_MAX_LANES = 4096               # cap on the lane extent of the working view


def _copy_kernel(x_ref, o_ref):
    # Straight VMEM tile copy (one (8k, 128m) tile per grid step).
    o_ref[...] = x_ref[...]


def _largest_aligned_divisor(n, unit, cap):
    """Largest d such that d % unit == 0, n % d == 0 and d <= cap (0 if none)."""
    if n % unit != 0:
        return 0
    m = n // unit
    best = 0
    d = 1
    while d * d <= m:
        if m % d == 0:
            for q in (d, m // d):
                cand = q * unit
                if cand <= cap:
                    best = max(best, cand)
        d += 1
    return best


def _choose_block(dim, unit, cap_elems):
    """(8,128)-friendly block extent: aligned divisor of `dim`, else full extent."""
    d = _largest_aligned_divisor(dim, unit, max(unit, cap_elems))
    return d if d else dim   # full-extent blocks are always legal BlockSpec dims


def _working_view(b, n):
    """Pick a lane-dense (R, C) 2-D factorisation of the flat row-major buffer."""
    total = b * n
    c = 0
    if total >= _SUBLANE * _LANE:
        # Prefer leaving >= 8 rows so full sublanes are used in every vreg.
        c = _largest_aligned_divisor(total, _LANE, min(_MAX_LANES, total // _SUBLANE))
    if c == 0:
        c = _largest_aligned_divisor(total, _LANE, _MAX_LANES)
    if c == 0:
        # No multiple-of-128 factor at all: keep the (batch, features) view.
        # Lane dim is then full-extent (masked stores) but still correct.
        # TODO(synk): pad to a 128 multiple for the pathological unaligned-huge case.
        return b, n
    return total // c, c


def reshape_pallas(x, *shape):
    """Pallas equivalent of torch `Reshape(*shape)(x)` == x.reshape(x.shape[0], *shape)."""
    b = x.shape[0]
    n_in = math.prod(x.shape[1:]) if x.ndim > 1 else 1

    # Resolve a single -1 in the target shape, like torch.reshape does.
    shape = list(shape)
    if -1 in shape:
        idx = shape.index(-1)
        known = math.prod(s for s in shape if s != -1)
        assert known != 0 and n_in % known == 0, (
            f"cannot infer -1 when reshaping {x.shape} -> ({b}, {tuple(shape)})")
        shape[idx] = n_in // known
    n_out = math.prod(shape) if shape else 1
    assert n_in == n_out, f"cannot reshape {x.shape} -> ({b}, {tuple(shape)})"

    itemsize = jnp.dtype(x.dtype).itemsize

    # Lane-dense 2-D working layout of the flat buffer (metadata-only reshape,
    # row-major == torch contiguous order).
    r, c = _working_view(b, n_in)
    x2d = x.reshape(r, c)

    # (8,128)-aligned tiles, capped at _TILE_BYTES per buffer.
    tn = _choose_block(c, _LANE, _TILE_BYTES // (_SUBLANE * itemsize))
    tb = _choose_block(r, _SUBLANE, max(_SUBLANE, _TILE_BYTES // (tn * itemsize)))

    # Ensure >= 2 grid programs so v7x's two TensorCores can split the copy.
    if r // tb == 1 and c // tn == 1:
        if tn % (2 * _LANE) == 0:
            tn //= 2
        elif tb % (2 * _SUBLANE) == 0:
            tb //= 2

    grid = (pl.cdiv(r, tb), pl.cdiv(c, tn))

    out2d = pl.pallas_call(
        _copy_kernel,
        out_shape=jax.ShapeDtypeStruct((r, c), x.dtype),
        grid_spec=pltpu.PrefetchScalarGridSpec(
            num_scalar_prefetch=0,
            grid=grid,
            in_specs=[pl.BlockSpec((tb, tn), lambda i, j: (i, j))],
            out_specs=pl.BlockSpec((tb, tn), lambda i, j: (i, j)),
        ),
        compiler_params=pltpu.CompilerParams(
            dimension_semantics=("parallel", "parallel"),
            vmem_limit_bytes=32 * 1024 * 1024,
        ),
    )(x2d)

    # Final reshape to (b, *shape) is pure metadata (no data movement).
    return out2d.reshape(b, *shape)


if __name__ == "__main__":
    key = jax.random.PRNGKey(0)
    # Typical GAN-generator usage: flat latent projection -> (C, H, W) feature map.
    # batch=2, flat features = 4*16*16 = 1024, reshaped to (4, 16, 16).
    x = jax.random.normal(key, (2, 4 * 16 * 16), dtype=jnp.float32)

    y = reshape_pallas(x, 4, 16, 16)
    y = jax.block_until_ready(y)

    ref = x.reshape(2, 4, 16, 16)
    assert y.shape == (2, 4, 16, 16)
    assert y.dtype == x.dtype
    assert bool(jnp.array_equal(y, ref))

    # Reverse direction with -1 inference (feature map -> flat), same kernel path.
    z = reshape_pallas(ref, -1)
    z = jax.block_until_ready(z)
    assert z.shape == (2, 1024)
    assert bool(jnp.array_equal(z, x))

    print("KERNEL_OK")
</pallas_src>

<mosaic_0001>
module attributes {stable_mosaic.version = 11 : i64} {
  func.func @_copy_kernel(%arg0: i32, %arg1: i32, %arg2: memref<8x128xf32, #tpu.memory_space<vmem>>, %arg3: memref<8x128xf32, #tpu.memory_space<vmem>>) attributes {dimension_semantics = [#tpu.dimension_semantics<parallel>, #tpu.dimension_semantics<parallel>], iteration_bounds = array<i64: 1, 2>, scalar_prefetch = 0 : i64, scratch_operands = 0 : i64, tpu.core_type = #tpu.core_type<tc>, window_params = [{transform_indices = @transform_0, window_bounds = array<i64: 8, 128>}, {transform_indices = @transform_1, window_bounds = array<i64: 8, 128>}]} {
    %c0 = arith.constant 0 : index
    %c0_0 = arith.constant 0 : index
    %0 = vector.load %arg2[%c0, %c0_0] : memref<8x128xf32, #tpu.memory_space<vmem>>, vector<8x128xf32>
    %c0_1 = arith.constant 0 : index
    %c0_2 = arith.constant 0 : index
    %1 = vector.load %arg3[%c0_1, %c0_2] : memref<8x128xf32, #tpu.memory_space<vmem>>, vector<8x128xf32>
    tpu.vector_store %arg3[%c0_1, %c0_2], %0 {strides = array<i32>} : memref<8x128xf32, #tpu.memory_space<vmem>>, vector<8x128xf32>,
    return
  }
  func.func @transform_0(%arg0: i32, %arg1: i32) -> (i32, i32) {
    %c0_i32 = arith.constant 0 : i32
    return %arg0, %arg1 : i32, i32
  }
  func.func @transform_1(%arg0: i32, %arg1: i32) -> (i32, i32) {
    %c0_i32 = arith.constant 0 : i32
    return %arg0, %arg1 : i32, i32
  }
}

</mosaic_0001>

<llo_original>
// kernel: tpu_custom_call.1
$region0: #{tpu_custom_call.1}
  #allocation0 [shape = 'u32[]', space=smem, size = 0x4, offset = 0x4, fixed_abs, tag = 'smem constant byte address 0x4 - core index']
  #allocation1 [shape = 'u32[144,128]{1,0:T(1,128)}', space=vmem, size = 0x12000, scoped, tag = 'internal scratch']
  %s0 = inlined_call_operand.hbm [shape: f32[8,256], index: 0, kind: input, shape index: {}]
  %s1 = inlined_call_operand.hbm [shape: f32[8,256], index: 1, kind: output, shape index: {}]
  %s2 = sld [smem:[#allocation0]]
  $region41: #{tpu_custom_call.1} parent=0
    _
  %s4 = ssub.s32 1, %s2
  %s5 = scalar_select 0, %s4, %s2
  $region1: #{tpu_custom_call.1} parent=0
    #allocation2 [shape = 'u8[8192]{0}', space=vmem, size = 0x2000, scoped, tag = 'input window, operand 0']
    #allocation3 [shape = 's32[2]{0}', space=sflag, size = 0x8, scoped, tag = 'scoped memory for tpu_custom_call.1']
    #allocation4 [shape = 's32[2]{0}', space=sflag, size = 0x8, scoped, tag = 'scoped memory for tpu_custom_call.1']
    #allocation5 [shape = 'u8[8192]{0}', space=vmem, size = 0x2000, scoped, tag = 'output window, operand 0']
    %6 = vsyncpa [#allocation3], 0
    %s7 = scalar_lea.sflag [#allocation3], 1
    %8 = vsyncpa %s7, 0
    %9 = vsyncpa [#allocation4], 0
    %s10 = scalar_lea.sflag [#allocation4], 1
    %11 = vsyncpa %s10, 0
    loop: start=0, step=1, limit=4
    $region2: #{tpu_custom_call.1} parent=1 // loop_pre_header
      _
    $region3: #{tpu_custom_call.1} parent=1 // loop_header
      %s13 = sphi 0, %s17
      %p14 = scmp.ge.s32.totalorder %s13, 4
      %s20 = sphi 0, %s32
      %s21 = sphi 0, %s28
      %s22 = sphi 0, %s20
      %s23 = sphi 0, %s21
      %s24 = sphi 0, %s22
      %s25 = sphi 0, %s23
      %s37 = sphi 0, %s39
      %s40 = sphi 0, %s37
      %s41 = sphi 0, %s40
      %s57 = sphi 0, %s41
      %s65 = sphi 0, %s67
      %s68 = sphi 0, %s65
      %s69 = sphi 0, %s68
      %s85 = sphi 0, %s69
    $region4: #{tpu_custom_call.1} parent=1 // loop_header_branch
      %16 = sbr.rel (%p14) target = $region8
    $region5: #{tpu_custom_call.1} parent=1 // loop_body
      %s18 = ssub.s32 %s13, 1
      %s19 = ssub.s32 %s13, 2
      %s26 = sadd.s32 1, %s21
      %p27 = scmp.ge.s32.totalorder %s26, 2
      %s28 = scalar_select %p27, 0, %s26
      %s29 = sadd.s32 1, %s20
      %s30 = scalar_select %p27, %s29, %s20
      %p31 = scmp.ge.s32.totalorder %s30, 1
      %s32 = scalar_select %p31, 0, %s30
      %s33 = ssub.s32 %s20, %s32
      %s34 = ssub.s32 %s21, %s28
      %s35 = sor.u32 %s33, %s34
      %p36 = scmp.eq.s32.totalorder %s35, 0
      %s38 = sadd.s32 %s37, 1
      %s39 = scalar_select %p36, %s37, %s38
      %p42 = pneg %p36
      %p43 = scmp.eq.s32.totalorder %s13, 1
      %p44 = por %p42, %p43
      %p45 = scmp.ne.s32.totalorder %s37, %s40
      %p46 = scmp.eq.s32.totalorder %s13, 0
      %p47 = por %p45, %p46
      %p48 = scmp.ne.s32.totalorder %s37, %s40
      %p49 = scmp.eq.s32.totalorder %s18, 1
      %p50 = por %p48, %p49
      %p51 = scmp.ne.s32.totalorder %s40, %s41
      %p52 = scmp.eq.s32.totalorder %s18, 0
      %p53 = por %p51, %p52
      %p54 = scmp.ne.s32.totalorder %s40, %s41
      %p55 = scmp.eq.s32.totalorder %s19, 1
      %p56 = por %p54, %p55
      %p58 = scmp.ne.s32.totalorder %s41, %s57
      %p59 = scmp.eq.s32.totalorder %s19, 0
      %p60 = por %p58, %p59
      %s61 = ssub.s32 %s20, %s32
      %s62 = ssub.s32 %s21, %s28
      %s63 = sor.u32 %s61, %s62
      %p64 = scmp.eq.s32.totalorder %s63, 0
      %s66 = sadd.s32 %s65, 1
      %s67 = scalar_select %p64, %s65, %s66
      %p70 = pneg %p64
      %p71 = scmp.eq.s32.totalorder %s13, 1
      %p72 = por %p70, %p71
      %p73 = scmp.ne.s32.totalorder %s65, %s68
      %p74 = scmp.eq.s32.totalorder %s13, 0
      %p75 = por %p73, %p74
      %p76 = scmp.ne.s32.totalorder %s65, %s68
      %p77 = scmp.eq.s32.totalorder %s18, 1
      %p78 = por %p76, %p77
      %p79 = scmp.ne.s32.totalorder %s68, %s69
      %p80 = scmp.eq.s32.totalorder %s18, 0
      %p81 = por %p79, %p80
      %p82 = scmp.ne.s32.totalorder %s68, %s69
      %p83 = scmp.eq.s32.totalorder %s19, 1
      %p84 = por %p82, %p83
      %p86 = scmp.ne.s32.totalorder %s69, %s85
      %p87 = scmp.eq.s32.totalorder %s19, 0
      %p88 = por %p86, %p87
      %p89 = scmp.le.s32.totalorder 1, %s13
      %p90 = scmp.lt.s32.totalorder %s13, 3
      %p91 = pnand %p89, %p90
      %p92 = pneg %p91
      // Predicated region
      $region9: #{tpu_custom_call.1} parent=5 // pred_check
        _
      $region10: #{tpu_custom_call.1} parent=5 // pred_check_branch
        %94 = sbr.rel (%p91) target = $region12
      $region11: #{tpu_custom_call.1} parent=5 // pred_region
        %s95 = ssub.s32 %s13, 1
      $region12: #{tpu_custom_call.1} parent=5 // pred_fallthru
        _
      %p96 = scmp.lt.s32.totalorder %s13, 2
      // Predicated region
      $region13: #{tpu_custom_call.1} parent=5 // pred_check
        %p97 = pneg %p96
      $region14: #{tpu_custom_call.1} parent=5 // pred_check_branch
        %99 = sbr.rel (%p97) target = $region16
      $region15: #{tpu_custom_call.1} parent=5 // pred_region
        // Predicated region
        $region17: #{tpu_custom_call.1} parent=15 // pred_check
          %p100 = pneg %p47
        $region18: #{tpu_custom_call.1} parent=15 // pred_check_branch
          %102 = sbr.rel (%p100) target = $region20
        $region19: #{tpu_custom_call.1} parent=15 // pred_region
          %s103 = sand.u32 %s37, 1
          %s104 = scalar_lea.sflag [#allocation3], %s103
          %s105 = sand.u32 %s37, 1
          %s106 = smul.addr %s105, 8
          %s107 = scalar_lea.vmem [#allocation2], %s106
          %s109 = ssub.s32 128, 128
          %110 = vsyncadd %s104, %s109
          %s111 = smul.addr %s20, 2
          %s112 = sadd.s32 %s21, %s111
          %s113 = smul.addr %s112, 128
          %s114 = scalar_lea.hbm %s0, %s113
          %s116 = sshll.u32 %s107, 4
          %s117 = int_to_ptr.vmem [resolvable:$true] %s116
          %119 = dma.hbm_to_vmem [thread:$0]  %s114, 128, %s117, %s104
        $region20: #{tpu_custom_call.1} parent=15 // pred_fallthru
          _
      $region16: #{tpu_custom_call.1} parent=5 // pred_fallthru
        _
      %p120 = scmp.le.s32.totalorder 1, %s13
      %p121 = scmp.lt.s32.totalorder %s13, 3
      %p122 = pnand %p120, %p121
      %p123 = pneg %p122
      // Predicated region
      $region21: #{tpu_custom_call.1} parent=5 // pred_check
        _
      $region22: #{tpu_custom_call.1} parent=5 // pred_check_branch
        %125 = sbr.rel (%p122) target = $region24
      $region23: #{tpu_custom_call.1} parent=5 // pred_region
        %s126 = ssub.s32 %s13, 1
        %s127 = sand.u32 %s40, 1
        %s128 = scalar_lea.sflag [#allocation3], %s127
        %s129 = sand.u32 %s40, 1
        %s130 = smul.addr %s129, 8
        %s131 = scalar_lea.vmem [#allocation2], %s130
        // Predicated region
        $region25: #{tpu_custom_call.1} parent=23 // pred_check
          %p132 = pneg %p53
        $region26: #{tpu_custom_call.1} parent=23 // pred_check_branch
          %134 = sbr.rel (%p132) target = $region28
        $region27: #{tpu_custom_call.1} parent=23 // pred_region
          %135 = dma.done %s128, 128
        $region28: #{tpu_custom_call.1} parent=23 // pred_fallthru
          _
        %s136 = sand.u32 %s40, 1
        %s137 = scalar_lea.sflag [#allocation3], %s136
        %s138 = sand.u32 %s40, 1
        %s139 = smul.addr %s138, 8
        %s140 = scalar_lea.vmem [#allocation2], %s139
        %p141 = pneg %p53
        %p142 = pneg %p50
        %p143 = pneg %p81
        %p144 = pneg %p78
        %s145 = sand.u32 %s68, 1
        %s146 = scalar_lea.sflag [#allocation4], %s145
        %s147 = sand.u32 %s68, 1
        %s148 = smul.addr %s147, 8
        %s149 = scalar_lea.vmem [#allocation5], %s148
        %v150 = vld [vmem:[%s131] sm:$0xff]
        %151 = vst [vmem:[%s149] sm:$0xff] %v150
        %s152 = sand.u32 %s68, 1
        %s153 = scalar_lea.sflag [#allocation4], %s152
        %s154 = sand.u32 %s68, 1
        %s155 = smul.addr %s154, 8
        %s156 = scalar_lea.vmem [#allocation5], %s155
        // Predicated region
        $region29: #{tpu_custom_call.1} parent=23 // pred_check
          %p157 = pneg %p78
        $region30: #{tpu_custom_call.1} parent=23 // pred_check_branch
          %159 = sbr.rel (%p157) target = $region32
        $region31: #{tpu_custom_call.1} parent=23 // pred_region
          %s161 = ssub.s32 128, 128
          %162 = vsyncadd %s153, %s161
          %s163 = smul.addr %s22, 2
          %s164 = sadd.s32 %s23, %s163
          %s165 = smul.addr %s164, 128
          %s166 = scalar_lea.hbm %s1, %s165
          %s168 = sshll.u32 %s156, 4
          %s169 = int_to_ptr.vmem [resolvable:$true] %s168
          %171 = dma.vmem_to_hbm [thread:$0]  %s169, 128, %s166, %s153
        $region32: #{tpu_custom_call.1} parent=23 // pred_fallthru
          _
      $region24: #{tpu_custom_call.1} parent=5 // pred_fallthru
        _
      %p172 = scmp.le.s32.totalorder 2, %s13
      // Predicated region
      $region33: #{tpu_custom_call.1} parent=5 // pred_check
        %p173 = pneg %p172
      $region34: #{tpu_custom_call.1} parent=5 // pred_check_branch
        %175 = sbr.rel (%p173) target = $region36
      $region35: #{tpu_custom_call.1} parent=5 // pred_region
        %s176 = ssub.s32 %s13, 2
        // Predicated region
        $region37: #{tpu_custom_call.1} parent=35 // pred_check
          %p177 = pneg %p84
        $region38: #{tpu_custom_call.1} parent=35 // pred_check_branch
          %179 = sbr.rel (%p177) target = $region40
        $region39: #{tpu_custom_call.1} parent=35 // pred_region
          %s180 = sand.u32 %s69, 1
          %s181 = scalar_lea.sflag [#allocation4], %s180
          %s182 = sand.u32 %s69, 1
          %s183 = smul.addr %s182, 8
          %s184 = scalar_lea.vmem [#allocation5], %s183
          %185 = dma.done %s181, 128
        $region40: #{tpu_custom_call.1} parent=35 // pred_fallthru
          _
      $region36: #{tpu_custom_call.1} parent=5 // pred_fallthru
        _
    $region6: #{tpu_custom_call.1} parent=1 // loop_footer
      %s17 = sadd.s32 1, %s13
    $region7: #{tpu_custom_call.1} parent=1 // loop_footer_branch
      %12 = sbr.rel target = $region3
    $region8: #{tpu_custom_call.1} parent=1 // loop_exit
      _
    %186 = vsyncpa [#allocation3], 1
    %s187 = scalar_lea.sflag [#allocation3], 1
    %188 = vsyncpa %s187, 1
    %189 = vsyncpa [#allocation4], 1
    %s190 = scalar_lea.sflag [#allocation4], 1
    %191 = vsyncpa %s190, 1

</llo_original>
